<compile_context>
chip_gen: v7x
topology: tpu7x:2x2x1
jax: 0.10.0
libtpu: 0.0.40
codegen_flags: <defaults>
</compile_context>

<pallas_src>
import math
import functools

import jax
import jax.numpy as jnp
from jax.experimental import pallas as pl
from jax.experimental.pallas import tpu as pltpu


def _token_embedding_gather_kernel(tok_ref,      # SMEM (N_pad,) int32  (scalar prefetch)
                                   table_hbm,    # HBM  (V, E)          (pl.ANY, no auto-DMA)
                                   out_ref,      # VMEM (TB, E)
                                   row_buf,      # VMEM scratch (TB, E)
                                   sems,         # DMA semaphores (TB,)
                                   *, scale, tokens_per_tile, vocab_size):
    tile = pl.program_id(0)
    base = tile * tokens_per_tile

    # Issue one row-DMA per token in this tile; all TB copies are in flight
    # concurrently (each has its own semaphore).
    copies = []
    for t in range(tokens_per_tile):
        tok = tok_ref[base + t]
        # Clamp like a "safe" gather: out-of-range ids must not read arbitrary HBM.
        tok = jnp.minimum(jnp.maximum(tok, 0), vocab_size - 1)
        cp = pltpu.make_async_copy(
            table_hbm.at[pl.ds(tok, 1), :],
            row_buf.at[pl.ds(t, 1), :],
            sems.at[t],
        )
        cp.start()
        copies.append(cp)

    # Wait for all row DMAs of this tile (same descriptors, no dummies).
    for cp in copies:
        cp.wait()

    # Scale in f32 then cast; tiny VPU work, hidden under the DMAs / pipelined
    # writeback of the previous tile's output block.
    rows = row_buf[...].astype(jnp.float32) * jnp.float32(scale)
    out_ref[...] = rows.astype(out_ref.dtype)


def token_embedding(tokens, embedding_table, *, tokens_per_tile=8):
    """tokens: int array (seq, batch); embedding_table: (vocab, emb_size) float.

    Returns (seq, batch, emb_size) = table[tokens] * sqrt(emb_size).
    """
    seq, batch = tokens.shape
    vocab, emb_size = embedding_table.shape
    scale = math.sqrt(emb_size)

    tb = int(tokens_per_tile)
    assert tb % 8 == 0, "tokens_per_tile should be a multiple of 8 (sublane tile)"

    n = seq * batch
    n_pad = ((n + tb - 1) // tb) * tb
    tok_flat = tokens.reshape(-1).astype(jnp.int32)
    if n_pad > n:
        tok_flat = jnp.concatenate(
            [tok_flat, jnp.zeros((n_pad - n,), jnp.int32)], axis=0)

    kernel = functools.partial(
        _token_embedding_gather_kernel,
        scale=scale, tokens_per_tile=tb, vocab_size=vocab)

    grid_spec = pltpu.PrefetchScalarGridSpec(
        num_scalar_prefetch=1,                      # token ids -> SMEM
        grid=(n_pad // tb,),
        in_specs=[
            pl.BlockSpec(memory_space=pl.ANY),      # table stays in HBM; manual DMA gather
        ],
        out_specs=pl.BlockSpec((tb, emb_size), lambda i, tok: (i, 0)),
        scratch_shapes=[
            pltpu.VMEM((tb, emb_size), embedding_table.dtype),
            pltpu.SemaphoreType.DMA((tb,)),
        ],
    )

    # Memory-bound gather: bytes = token ids + gathered rows (read) + output (write).
    itemsize = jnp.dtype(embedding_table.dtype).itemsize
    cost = pl.CostEstimate(
        flops=n_pad * emb_size,                     # the sqrt(E) scale multiply
        transcendentals=0,
        bytes_accessed=4 * n_pad
        + n_pad * emb_size * itemsize
        + n_pad * emb_size * itemsize,
    )

    out_flat = pl.pallas_call(
        kernel,
        out_shape=jax.ShapeDtypeStruct((n_pad, emb_size), embedding_table.dtype),
        grid_spec=grid_spec,
        compiler_params=pltpu.CompilerParams(
            dimension_semantics=("parallel",)),     # shard token tiles across cores
        cost_estimate=cost,
    )(tok_flat, embedding_table)

    return out_flat[:n].reshape(seq, batch, emb_size)


if __name__ == "__main__":
    # Small shapes consistent with the module; emb_size=128 keeps output stores
    # lane-dense (multiple of 128 lanes).
    vocab_size = 64
    emb_size = 128
    seq, batch = 8, 2

    key = jax.random.PRNGKey(0)
    k_emb, k_tok = jax.random.split(key)

    # nn.Embedding default init: weights ~ N(0, 1)
    embedding_table = jax.random.normal(k_emb, (vocab_size, emb_size),
                                        dtype=jnp.float32)
    tokens = jax.random.randint(k_tok, (seq, batch), 0, vocab_size,
                                dtype=jnp.int32)

    out = token_embedding(tokens, embedding_table, tokens_per_tile=8)
    out = jax.block_until_ready(out)

    # Reference check (plain JAX gather) — exact f32 path, no rounding slack needed.
    ref = embedding_table[tokens] * math.sqrt(emb_size)
    assert out.shape == (seq, batch, emb_size)
    assert jnp.allclose(out, ref, atol=1e-5, rtol=1e-5)

    print("KERNEL_OK")
</pallas_src>

<mosaic_0001>
module attributes {stable_mosaic.version = 11 : i64} {
  func.func @_token_embedding_gather_kernel(%arg0: i32, %arg1: memref<16xi32, #tpu.memory_space<smem>>, %arg2: memref<64x128xf32, #tpu.memory_space<any>>, %arg3: memref<8x128xf32, #tpu.memory_space<vmem>>, %arg4: memref<8x128xf32, #tpu.memory_space<vmem>>, %arg5: memref<8x!tpu.dma_semaphore, #tpu.memory_space<semaphore_mem>>) attributes {dimension_semantics = [#tpu.dimension_semantics<parallel>], iteration_bounds = array<i64: 2>, scalar_prefetch = 1 : i64, scratch_operands = 2 : i64, tpu.core_type = #tpu.core_type<tc>, window_params = [{}, {transform_indices = @transform_1, window_bounds = array<i64: 8, 128>}]} {
    %c8_i32 = arith.constant 8 : i32
    %0 = arith.muli %arg0, %c8_i32 : i32
    %c0_i32 = arith.constant 0 : i32
    %1 = arith.addi %0, %c0_i32 : i32
    %2 = arith.index_cast %1 : i32 to index
    %3 = memref.load %arg1[%2] : memref<16xi32, #tpu.memory_space<smem>>
    %c0_i32_0 = arith.constant 0 : i32
    %4 = arith.maxsi %3, %c0_i32_0 : i32
    %c63_i32 = arith.constant 63 : i32
    %5 = arith.minsi %4, %c63_i32 : i32
    %c0_i32_1 = arith.constant 0 : i32
    %c0_i32_2 = arith.constant 0 : i32
    %6 = tpu.memref_slice %arg2[%5, %c0_i32_2] : memref<64x128xf32, #tpu.memory_space<any>> -> memref<1x128xf32, #tpu.memory_space<any>>
    %c0_i32_3 = arith.constant 0 : i32
    %c0_i32_4 = arith.constant 0 : i32
    %7 = tpu.memref_slice %arg4[%c0_i32_3, %c0_i32_4] : memref<8x128xf32, #tpu.memory_space<vmem>> -> memref<1x128xf32, #tpu.memory_space<vmem>>
    %8 = tpu.memref_slice %arg5[%c0_i32_1] : memref<8x!tpu.dma_semaphore, #tpu.memory_space<semaphore_mem>> -> memref<1x!tpu.dma_semaphore, #tpu.memory_space<semaphore_mem>>
    %9 = tpu.memref_squeeze %8 : memref<1x!tpu.dma_semaphore, #tpu.memory_space<semaphore_mem>> -> memref<!tpu.dma_semaphore, #tpu.memory_space<semaphore_mem>>
    tpu.enqueue_dma source(%6 : memref<1x128xf32, #tpu.memory_space<any>>) target(%7 : memref<1x128xf32, #tpu.memory_space<vmem>>) target_semaphore(%9 : memref<!tpu.dma_semaphore, #tpu.memory_space<semaphore_mem>>)
    %c1_i32 = arith.constant 1 : i32
    %10 = arith.addi %0, %c1_i32 : i32
    %11 = arith.index_cast %10 : i32 to index
    %12 = memref.load %arg1[%11] : memref<16xi32, #tpu.memory_space<smem>>
    %c0_i32_5 = arith.constant 0 : i32
    %13 = arith.maxsi %12, %c0_i32_5 : i32
    %c63_i32_6 = arith.constant 63 : i32
    %14 = arith.minsi %13, %c63_i32_6 : i32
    %c1_i32_7 = arith.constant 1 : i32
    %c0_i32_8 = arith.constant 0 : i32
    %15 = tpu.memref_slice %arg2[%14, %c0_i32_8] : memref<64x128xf32, #tpu.memory_space<any>> -> memref<1x128xf32, #tpu.memory_space<any>>
    %c1_i32_9 = arith.constant 1 : i32
    %c0_i32_10 = arith.constant 0 : i32
    %16 = tpu.memref_slice %arg4[%c1_i32_9, %c0_i32_10] : memref<8x128xf32, #tpu.memory_space<vmem>> -> memref<1x128xf32, #tpu.memory_space<vmem>>
    %17 = tpu.memref_slice %arg5[%c1_i32_7] : memref<8x!tpu.dma_semaphore, #tpu.memory_space<semaphore_mem>> -> memref<1x!tpu.dma_semaphore, #tpu.memory_space<semaphore_mem>>
    %18 = tpu.memref_squeeze %17 : memref<1x!tpu.dma_semaphore, #tpu.memory_space<semaphore_mem>> -> memref<!tpu.dma_semaphore, #tpu.memory_space<semaphore_mem>>
    tpu.enqueue_dma source(%15 : memref<1x128xf32, #tpu.memory_space<any>>) target(%16 : memref<1x128xf32, #tpu.memory_space<vmem>>) target_semaphore(%18 : memref<!tpu.dma_semaphore, #tpu.memory_space<semaphore_mem>>)
    %c2_i32 = arith.constant 2 : i32
    %19 = arith.addi %0, %c2_i32 : i32
    %20 = arith.index_cast %19 : i32 to index
    %21 = memref.load %arg1[%20] : memref<16xi32, #tpu.memory_space<smem>>
    %c0_i32_11 = arith.constant 0 : i32
    %22 = arith.maxsi %21, %c0_i32_11 : i32
    %c63_i32_12 = arith.constant 63 : i32
    %23 = arith.minsi %22, %c63_i32_12 : i32
    %c2_i32_13 = arith.constant 2 : i32
    %c0_i32_14 = arith.constant 0 : i32
    %24 = tpu.memref_slice %arg2[%23, %c0_i32_14] : memref<64x128xf32, #tpu.memory_space<any>> -> memref<1x128xf32, #tpu.memory_space<any>>
    %c2_i32_15 = arith.constant 2 : i32
    %c0_i32_16 = arith.constant 0 : i32
    %25 = tpu.memref_slice %arg4[%c2_i32_15, %c0_i32_16] : memref<8x128xf32, #tpu.memory_space<vmem>> -> memref<1x128xf32, #tpu.memory_space<vmem>>
    %26 = tpu.memref_slice %arg5[%c2_i32_13] : memref<8x!tpu.dma_semaphore, #tpu.memory_space<semaphore_mem>> -> memref<1x!tpu.dma_semaphore, #tpu.memory_space<semaphore_mem>>
    %27 = tpu.memref_squeeze %26 : memref<1x!tpu.dma_semaphore, #tpu.memory_space<semaphore_mem>> -> memref<!tpu.dma_semaphore, #tpu.memory_space<semaphore_mem>>
    tpu.enqueue_dma source(%24 : memref<1x128xf32, #tpu.memory_space<any>>) target(%25 : memref<1x128xf32, #tpu.memory_space<vmem>>) target_semaphore(%27 : memref<!tpu.dma_semaphore, #tpu.memory_space<semaphore_mem>>)
    %c3_i32 = arith.constant 3 : i32
    %28 = arith.addi %0, %c3_i32 : i32
    %29 = arith.index_cast %28 : i32 to index
    %30 = memref.load %arg1[%29] : memref<16xi32, #tpu.memory_space<smem>>
    %c0_i32_17 = arith.constant 0 : i32
    %31 = arith.maxsi %30, %c0_i32_17 : i32
    %c63_i32_18 = arith.constant 63 : i32
    %32 = arith.minsi %31, %c63_i32_18 : i32
    %c3_i32_19 = arith.constant 3 : i32
    %c0_i32_20 = arith.constant 0 : i32
    %33 = tpu.memref_slice %arg2[%32, %c0_i32_20] : memref<64x128xf32, #tpu.memory_space<any>> -> memref<1x128xf32, #tpu.memory_space<any>>
    %c3_i32_21 = arith.constant 3 : i32
    %c0_i32_22 = arith.constant 0 : i32
    %34 = tpu.memref_slice %arg4[%c3_i32_21, %c0_i32_22] : memref<8x128xf32, #tpu.memory_space<vmem>> -> memref<1x128xf32, #tpu.memory_space<vmem>>
    %35 = tpu.memref_slice %arg5[%c3_i32_19] : memref<8x!tpu.dma_semaphore, #tpu.memory_space<semaphore_mem>> -> memref<1x!tpu.dma_semaphore, #tpu.memory_space<semaphore_mem>>
    %36 = tpu.memref_squeeze %35 : memref<1x!tpu.dma_semaphore, #tpu.memory_space<semaphore_mem>> -> memref<!tpu.dma_semaphore, #tpu.memory_space<semaphore_mem>>
    tpu.enqueue_dma source(%33 : memref<1x128xf32, #tpu.memory_space<any>>) target(%34 : memref<1x128xf32, #tpu.memory_space<vmem>>) target_semaphore(%36 : memref<!tpu.dma_semaphore, #tpu.memory_space<semaphore_mem>>)
    %c4_i32 = arith.constant 4 : i32
    %37 = arith.addi %0, %c4_i32 : i32
    %38 = arith.index_cast %37 : i32 to index
    %39 = memref.load %arg1[%38] : memref<16xi32, #tpu.memory_space<smem>>
    %c0_i32_23 = arith.constant 0 : i32
    %40 = arith.maxsi %39, %c0_i32_23 : i32
    %c63_i32_24 = arith.constant 63 : i32
    %41 = arith.minsi %40, %c63_i32_24 : i32
    %c4_i32_25 = arith.constant 4 : i32
    %c0_i32_26 = arith.constant 0 : i32
    %42 = tpu.memref_slice %arg2[%41, %c0_i32_26] : memref<64x128xf32, #tpu.memory_space<any>> -> memref<1x128xf32, #tpu.memory_space<any>>
    %c4_i32_27 = arith.constant 4 : i32
    %c0_i32_28 = arith.constant 0 : i32
    %43 = tpu.memref_slice %arg4[%c4_i32_27, %c0_i32_28] : memref<8x128xf32, #tpu.memory_space<vmem>> -> memref<1x128xf32, #tpu.memory_space<vmem>>
    %44 = tpu.memref_slice %arg5[%c4_i32_25] : memref<8x!tpu.dma_semaphore, #tpu.memory_space<semaphore_mem>> -> memref<1x!tpu.dma_semaphore, #tpu.memory_space<semaphore_mem>>
    %45 = tpu.memref_squeeze %44 : memref<1x!tpu.dma_semaphore, #tpu.memory_space<semaphore_mem>> -> memref<!tpu.dma_semaphore, #tpu.memory_space<semaphore_mem>>
    tpu.enqueue_dma source(%42 : memref<1x128xf32, #tpu.memory_space<any>>) target(%43 : memref<1x128xf32, #tpu.memory_space<vmem>>) target_semaphore(%45 : memref<!tpu.dma_semaphore, #tpu.memory_space<semaphore_mem>>)
    %c5_i32 = arith.constant 5 : i32
    %46 = arith.addi %0, %c5_i32 : i32
    %47 = arith.index_cast %46 : i32 to index
    %48 = memref.load %arg1[%47] : memref<16xi32, #tpu.memory_space<smem>>
    %c0_i32_29 = arith.constant 0 : i32
    %49 = arith.maxsi %48, %c0_i32_29 : i32
    %c63_i32_30 = arith.constant 63 : i32
    %50 = arith.minsi %49, %c63_i32_30 : i32
    %c5_i32_31 = arith.constant 5 : i32
    %c0_i32_32 = arith.constant 0 : i32
    %51 = tpu.memref_slice %arg2[%50, %c0_i32_32] : memref<64x128xf32, #tpu.memory_space<any>> -> memref<1x128xf32, #tpu.memory_space<any>>
    %c5_i32_33 = arith.constant 5 : i32
    %c0_i32_34 = arith.constant 0 : i32
    %52 = tpu.memref_slice %arg4[%c5_i32_33, %c0_i32_34] : memref<8x128xf32, #tpu.memory_space<vmem>> -> memref<1x128xf32, #tpu.memory_space<vmem>>
    %53 = tpu.memref_slice %arg5[%c5_i32_31] : memref<8x!tpu.dma_semaphore, #tpu.memory_space<semaphore_mem>> -> memref<1x!tpu.dma_semaphore, #tpu.memory_space<semaphore_mem>>
    %54 = tpu.memref_squeeze %53 : memref<1x!tpu.dma_semaphore, #tpu.memory_space<semaphore_mem>> -> memref<!tpu.dma_semaphore, #tpu.memory_space<semaphore_mem>>
    tpu.enqueue_dma source(%51 : memref<1x128xf32, #tpu.memory_space<any>>) target(%52 : memref<1x128xf32, #tpu.memory_space<vmem>>) target_semaphore(%54 : memref<!tpu.dma_semaphore, #tpu.memory_space<semaphore_mem>>)
    %c6_i32 = arith.constant 6 : i32
    %55 = arith.addi %0, %c6_i32 : i32
    %56 = arith.index_cast %55 : i32 to index
    %57 = memref.load %arg1[%56] : memref<16xi32, #tpu.memory_space<smem>>
    %c0_i32_35 = arith.constant 0 : i32
    %58 = arith.maxsi %57, %c0_i32_35 : i32
    %c63_i32_36 = arith.constant 63 : i32
    %59 = arith.minsi %58, %c63_i32_36 : i32
    %c6_i32_37 = arith.constant 6 : i32
    %c0_i32_38 = arith.constant 0 : i32
    %60 = tpu.memref_slice %arg2[%59, %c0_i32_38] : memref<64x128xf32, #tpu.memory_space<any>> -> memref<1x128xf32, #tpu.memory_space<any>>
    %c6_i32_39 = arith.constant 6 : i32
    %c0_i32_40 = arith.constant 0 : i32
    %61 = tpu.memref_slice %arg4[%c6_i32_39, %c0_i32_40] : memref<8x128xf32, #tpu.memory_space<vmem>> -> memref<1x128xf32, #tpu.memory_space<vmem>>
    %62 = tpu.memref_slice %arg5[%c6_i32_37] : memref<8x!tpu.dma_semaphore, #tpu.memory_space<semaphore_mem>> -> memref<1x!tpu.dma_semaphore, #tpu.memory_space<semaphore_mem>>
    %63 = tpu.memref_squeeze %62 : memref<1x!tpu.dma_semaphore, #tpu.memory_space<semaphore_mem>> -> memref<!tpu.dma_semaphore, #tpu.memory_space<semaphore_mem>>
    tpu.enqueue_dma source(%60 : memref<1x128xf32, #tpu.memory_space<any>>) target(%61 : memref<1x128xf32, #tpu.memory_space<vmem>>) target_semaphore(%63 : memref<!tpu.dma_semaphore, #tpu.memory_space<semaphore_mem>>)
    %c7_i32 = arith.constant 7 : i32
    %64 = arith.addi %0, %c7_i32 : i32
    %65 = arith.index_cast %64 : i32 to index
    %66 = memref.load %arg1[%65] : memref<16xi32, #tpu.memory_space<smem>>
    %c0_i32_41 = arith.constant 0 : i32
    %67 = arith.maxsi %66, %c0_i32_41 : i32
    %c63_i32_42 = arith.constant 63 : i32
    %68 = arith.minsi %67, %c63_i32_42 : i32
    %c7_i32_43 = arith.constant 7 : i32
    %c0_i32_44 = arith.constant 0 : i32
    %69 = tpu.memref_slice %arg2[%68, %c0_i32_44] : memref<64x128xf32, #tpu.memory_space<any>> -> memref<1x128xf32, #tpu.memory_space<any>>
    %c7_i32_45 = arith.constant 7 : i32
    %c0_i32_46 = arith.constant 0 : i32
    %70 = tpu.memref_slice %arg4[%c7_i32_45, %c0_i32_46] : memref<8x128xf32, #tpu.memory_space<vmem>> -> memref<1x128xf32, #tpu.memory_space<vmem>>
    %71 = tpu.memref_slice %arg5[%c7_i32_43] : memref<8x!tpu.dma_semaphore, #tpu.memory_space<semaphore_mem>> -> memref<1x!tpu.dma_semaphore, #tpu.memory_space<semaphore_mem>>
    %72 = tpu.memref_squeeze %71 : memref<1x!tpu.dma_semaphore, #tpu.memory_space<semaphore_mem>> -> memref<!tpu.dma_semaphore, #tpu.memory_space<semaphore_mem>>
    tpu.enqueue_dma source(%69 : memref<1x128xf32, #tpu.memory_space<any>>) target(%70 : memref<1x128xf32, #tpu.memory_space<vmem>>) target_semaphore(%72 : memref<!tpu.dma_semaphore, #tpu.memory_space<semaphore_mem>>)
    %c0_i32_47 = arith.constant 0 : i32
    %c0_i32_48 = arith.constant 0 : i32
    %73 = tpu.memref_slice %arg2[%5, %c0_i32_48] : memref<64x128xf32, #tpu.memory_space<any>> -> memref<1x128xf32, #tpu.memory_space<any>>
    %c0_i32_49 = arith.constant 0 : i32
    %c0_i32_50 = arith.constant 0 : i32
    %74 = tpu.memref_slice %arg4[%c0_i32_49, %c0_i32_50] : memref<8x128xf32, #tpu.memory_space<vmem>> -> memref<1x128xf32, #tpu.memory_space<vmem>>
    %75 = tpu.memref_slice %arg5[%c0_i32_47] : memref<8x!tpu.dma_semaphore, #tpu.memory_space<semaphore_mem>> -> memref<1x!tpu.dma_semaphore, #tpu.memory_space<semaphore_mem>>
    %76 = tpu.memref_squeeze %75 : memref<1x!tpu.dma_semaphore, #tpu.memory_space<semaphore_mem>> -> memref<!tpu.dma_semaphore, #tpu.memory_space<semaphore_mem>>
    tpu.wait_dma2 semaphore(%76 : memref<!tpu.dma_semaphore, #tpu.memory_space<semaphore_mem>>) src(%73 : memref<1x128xf32, #tpu.memory_space<any>>) dst(%74 : memref<1x128xf32, #tpu.memory_space<vmem>>)
    %c1_i32_51 = arith.constant 1 : i32
    %c0_i32_52 = arith.constant 0 : i32
    %77 = tpu.memref_slice %arg2[%14, %c0_i32_52] : memref<64x128xf32, #tpu.memory_space<any>> -> memref<1x128xf32, #tpu.memory_space<any>>
    %c1_i32_53 = arith.constant 1 : i32
    %c0_i32_54 = arith.constant 0 : i32
    %78 = tpu.memref_slice %arg4[%c1_i32_53, %c0_i32_54] : memref<8x128xf32, #tpu.memory_space<vmem>> -> memref<1x128xf32, #tpu.memory_space<vmem>>
    %79 = tpu.memref_slice %arg5[%c1_i32_51] : memref<8x!tpu.dma_semaphore, #tpu.memory_space<semaphore_mem>> -> memref<1x!tpu.dma_semaphore, #tpu.memory_space<semaphore_mem>>
    %80 = tpu.memref_squeeze %79 : memref<1x!tpu.dma_semaphore, #tpu.memory_space<semaphore_mem>> -> memref<!tpu.dma_semaphore, #tpu.memory_space<semaphore_mem>>
    tpu.wait_dma2 semaphore(%80 : memref<!tpu.dma_semaphore, #tpu.memory_space<semaphore_mem>>) src(%77 : memref<1x128xf32, #tpu.memory_space<any>>) dst(%78 : memref<1x128xf32, #tpu.memory_space<vmem>>)
    %c2_i32_55 = arith.constant 2 : i32
    %c0_i32_56 = arith.constant 0 : i32
    %81 = tpu.memref_slice %arg2[%23, %c0_i32_56] : memref<64x128xf32, #tpu.memory_space<any>> -> memref<1x128xf32, #tpu.memory_space<any>>
    %c2_i32_57 = arith.constant 2 : i32
    %c0_i32_58 = arith.constant 0 : i32
    %82 = tpu.memref_slice %arg4[%c2_i32_57, %c0_i32_58] : memref<8x128xf32, #tpu.memory_space<vmem>> -> memref<1x128xf32, #tpu.memory_space<vmem>>
    %83 = tpu.memref_slice %arg5[%c2_i32_55] : memref<8x!tpu.dma_semaphore, #tpu.memory_space<semaphore_mem>> -> memref<1x!tpu.dma_semaphore, #tpu.memory_space<semaphore_mem>>
    %84 = tpu.memref_squeeze %83 : memref<1x!tpu.dma_semaphore, #tpu.memory_space<semaphore_mem>> -> memref<!tpu.dma_semaphore, #tpu.memory_space<semaphore_mem>>
    tpu.wait_dma2 semaphore(%84 : memref<!tpu.dma_semaphore, #tpu.memory_space<semaphore_mem>>) src(%81 : memref<1x128xf32, #tpu.memory_space<any>>) dst(%82 : memref<1x128xf32, #tpu.memory_space<vmem>>)
    %c3_i32_59 = arith.constant 3 : i32
    %c0_i32_60 = arith.constant 0 : i32
    %85 = tpu.memref_slice %arg2[%32, %c0_i32_60] : memref<64x128xf32, #tpu.memory_space<any>> -> memref<1x128xf32, #tpu.memory_space<any>>
    %c3_i32_61 = arith.constant 3 : i32
    %c0_i32_62 = arith.constant 0 : i32
    %86 = tpu.memref_slice %arg4[%c3_i32_61, %c0_i32_62] : memref<8x128xf32, #tpu.memory_space<vmem>> -> memref<1x128xf32, #tpu.memory_space<vmem>>
    %87 = tpu.memref_slice %arg5[%c3_i32_59] : memref<8x!tpu.dma_semaphore, #tpu.memory_space<semaphore_mem>> -> memref<1x!tpu.dma_semaphore, #tpu.memory_space<semaphore_mem>>
    %88 = tpu.memref_squeeze %87 : memref<1x!tpu.dma_semaphore, #tpu.memory_space<semaphore_mem>> -> memref<!tpu.dma_semaphore, #tpu.memory_space<semaphore_mem>>
    tpu.wait_dma2 semaphore(%88 : memref<!tpu.dma_semaphore, #tpu.memory_space<semaphore_mem>>) src(%85 : memref<1x128xf32, #tpu.memory_space<any>>) dst(%86 : memref<1x128xf32, #tpu.memory_space<vmem>>)
    %c4_i32_63 = arith.constant 4 : i32
    %c0_i32_64 = arith.constant 0 : i32
    %89 = tpu.memref_slice %arg2[%41, %c0_i32_64] : memref<64x128xf32, #tpu.memory_space<any>> -> memref<1x128xf32, #tpu.memory_space<any>>
    %c4_i32_65 = arith.constant 4 : i32
    %c0_i32_66 = arith.constant 0 : i32
    %90 = tpu.memref_slice %arg4[%c4_i32_65, %c0_i32_66] : memref<8x128xf32, #tpu.memory_space<vmem>> -> memref<1x128xf32, #tpu.memory_space<vmem>>
    %91 = tpu.memref_slice %arg5[%c4_i32_63] : memref<8x!tpu.dma_semaphore, #tpu.memory_space<semaphore_mem>> -> memref<1x!tpu.dma_semaphore, #tpu.memory_space<semaphore_mem>>
    %92 = tpu.memref_squeeze %91 : memref<1x!tpu.dma_semaphore, #tpu.memory_space<semaphore_mem>> -> memref<!tpu.dma_semaphore, #tpu.memory_space<semaphore_mem>>
    tpu.wait_dma2 semaphore(%92 : memref<!tpu.dma_semaphore, #tpu.memory_space<semaphore_mem>>) src(%89 : memref<1x128xf32, #tpu.memory_space<any>>) dst(%90 : memref<1x128xf32, #tpu.memory_space<vmem>>)
    %c5_i32_67 = arith.constant 5 : i32
    %c0_i32_68 = arith.constant 0 : i32
    %93 = tpu.memref_slice %arg2[%50, %c0_i32_68] : memref<64x128xf32, #tpu.memory_space<any>> -> memref<1x128xf32, #tpu.memory_space<any>>
    %c5_i32_69 = arith.constant 5 : i32
    %c0_i32_70 = arith.constant 0 : i32
    %94 = tpu.memref_slice %arg4[%c5_i32_69, %c0_i32_70] : memref<8x128xf32, #tpu.memory_space<vmem>> -> memref<1x128xf32, #tpu.memory_space<vmem>>
    %95 = tpu.memref_slice %arg5[%c5_i32_67] : memref<8x!tpu.dma_semaphore, #tpu.memory_space<semaphore_mem>> -> memref<1x!tpu.dma_semaphore, #tpu.memory_space<semaphore_mem>>
    %96 = tpu.memref_squeeze %95 : memref<1x!tpu.dma_semaphore, #tpu.memory_space<semaphore_mem>> -> memref<!tpu.dma_semaphore, #tpu.memory_space<semaphore_mem>>
    tpu.wait_dma2 semaphore(%96 : memref<!tpu.dma_semaphore, #tpu.memory_space<semaphore_mem>>) src(%93 : memref<1x128xf32, #tpu.memory_space<any>>) dst(%94 : memref<1x128xf32, #tpu.memory_space<vmem>>)
    %c6_i32_71 = arith.constant 6 : i32
    %c0_i32_72 = arith.constant 0 : i32
    %97 = tpu.memref_slice %arg2[%59, %c0_i32_72] : memref<64x128xf32, #tpu.memory_space<any>> -> memref<1x128xf32, #tpu.memory_space<any>>
    %c6_i32_73 = arith.constant 6 : i32
    %c0_i32_74 = arith.constant 0 : i32
    %98 = tpu.memref_slice %arg4[%c6_i32_73, %c0_i32_74] : memref<8x128xf32, #tpu.memory_space<vmem>> -> memref<1x128xf32, #tpu.memory_space<vmem>>
    %99 = tpu.memref_slice %arg5[%c6_i32_71] : memref<8x!tpu.dma_semaphore, #tpu.memory_space<semaphore_mem>> -> memref<1x!tpu.dma_semaphore, #tpu.memory_space<semaphore_mem>>
    %100 = tpu.memref_squeeze %99 : memref<1x!tpu.dma_semaphore, #tpu.memory_space<semaphore_mem>> -> memref<!tpu.dma_semaphore, #tpu.memory_space<semaphore_mem>>
    tpu.wait_dma2 semaphore(%100 : memref<!tpu.dma_semaphore, #tpu.memory_space<semaphore_mem>>) src(%97 : memref<1x128xf32, #tpu.memory_space<any>>) dst(%98 : memref<1x128xf32, #tpu.memory_space<vmem>>)
    %c7_i32_75 = arith.constant 7 : i32
    %c0_i32_76 = arith.constant 0 : i32
    %101 = tpu.memref_slice %arg2[%68, %c0_i32_76] : memref<64x128xf32, #tpu.memory_space<any>> -> memref<1x128xf32, #tpu.memory_space<any>>
    %c7_i32_77 = arith.constant 7 : i32
    %c0_i32_78 = arith.constant 0 : i32
    %102 = tpu.memref_slice %arg4[%c7_i32_77, %c0_i32_78] : memref<8x128xf32, #tpu.memory_space<vmem>> -> memref<1x128xf32, #tpu.memory_space<vmem>>
    %103 = tpu.memref_slice %arg5[%c7_i32_75] : memref<8x!tpu.dma_semaphore, #tpu.memory_space<semaphore_mem>> -> memref<1x!tpu.dma_semaphore, #tpu.memory_space<semaphore_mem>>
    %104 = tpu.memref_squeeze %103 : memref<1x!tpu.dma_semaphore, #tpu.memory_space<semaphore_mem>> -> memref<!tpu.dma_semaphore, #tpu.memory_space<semaphore_mem>>
    tpu.wait_dma2 semaphore(%104 : memref<!tpu.dma_semaphore, #tpu.memory_space<semaphore_mem>>) src(%101 : memref<1x128xf32, #tpu.memory_space<any>>) dst(%102 : memref<1x128xf32, #tpu.memory_space<vmem>>)
    %c0 = arith.constant 0 : index
    %c0_79 = arith.constant 0 : index
    %105 = vector.load %arg4[%c0, %c0_79] : memref<8x128xf32, #tpu.memory_space<vmem>>, vector<8x128xf32>
    %cst = arith.constant 11.3137083 : f32
    %106 = vector.broadcast %cst : f32 to vector<8x128xf32>
    %107 = arith.mulf %105, %106 : vector<8x128xf32>
    %c0_80 = arith.constant 0 : index
    %c0_81 = arith.constant 0 : index
    %108 = vector.load %arg3[%c0_80, %c0_81] : memref<8x128xf32, #tpu.memory_space<vmem>>, vector<8x128xf32>
    tpu.vector_store %arg3[%c0_80, %c0_81], %107 {strides = array<i32>} : memref<8x128xf32, #tpu.memory_space<vmem>>, vector<8x128xf32>,
    return
  }
  func.func @transform_1(%arg0: i32, %arg1: memref<16xi32, #tpu.memory_space<smem>>) -> (i32, i32) {
    %c0_i32 = arith.constant 0 : i32
    %c0_i32_0 = arith.constant 0 : i32
    return %arg0, %c0_i32 : i32, i32
  }
}

</mosaic_0001>

<llo_original>
// kernel: tpu_custom_call.1
$region0: #{tpu_custom_call.1}
  #allocation0 [shape = 'u32[]', space=smem, size = 0x4, offset = 0x4, fixed_abs, tag = 'smem constant byte address 0x4 - core index']
  #allocation1 [shape = 'u32[144,128]{1,0:T(1,128)}', space=vmem, size = 0x12000, scoped, tag = 'internal scratch']
  #allocation2 [shape = 'f32[8,128]{1,0:T(8,128)}', space=vmem, size = 0x1000, scoped, tag = 'scratch operand']
  #allocation3 [shape = 's32[8]{0}', space=sflag, size = 0x20, scoped, tag = 'scratch operand']
  #allocation4 [shape = 's32[1]{0}', space=sflag, size = 0x4, scoped, tag = 'scoped memory for tpu_custom_call.1']
  #allocation5 [shape = 'u8[512]{0}', space=smem, size = 0x200, scoped, tag = 'prefetched SMEM operand 0']
  #allocation8 [shape = 's32[]', space=sflag, size = 0x4, offset = 0, fixed_abs, tag = 'sflag constant byte address 0x0 - dummy sync flag']
  #allocation9 [shape = 's32[]', space=sflag, size = 0x4, offset = 0, fixed_abs, tag = 'sflag constant byte address 0x0 - dummy sync flag']
  #allocation10 [shape = 'u32[]', space=smem, size = 0x4, offset = 0x44, fixed_abs, tag = 'smem constant byte address 0x44 - assertion arg 0']
  #allocation11 [shape = 'u32[]', space=smem, size = 0x4, offset = 0x48, fixed_abs, tag = 'smem constant byte address 0x48 - assertion arg 1']
  #allocation12 [shape = 's32[]', space=sflag, size = 0x4, offset = 0, fixed_abs, tag = 'sflag constant byte address 0x0 - dummy sync flag']
  #allocation13 [shape = 's32[]', space=sflag, size = 0x4, offset = 0, fixed_abs, tag = 'sflag constant byte address 0x0 - dummy sync flag']
  #allocation14 [shape = 's32[]', space=sflag, size = 0x4, offset = 0, fixed_abs, tag = 'sflag constant byte address 0x0 - dummy sync flag']
  #allocation15 [shape = 's32[]', space=sflag, size = 0x4, offset = 0, fixed_abs, tag = 'sflag constant byte address 0x0 - dummy sync flag']
  #allocation16 [shape = 's32[]', space=sflag, size = 0x4, offset = 0, fixed_abs, tag = 'sflag constant byte address 0x0 - dummy sync flag']
  #allocation17 [shape = 's32[]', space=sflag, size = 0x4, offset = 0, fixed_abs, tag = 'sflag constant byte address 0x0 - dummy sync flag']
  #allocation18 [shape = 's32[]', space=sflag, size = 0x4, offset = 0, fixed_abs, tag = 'sflag constant byte address 0x0 - dummy sync flag']
  #allocation19 [shape = 's32[]', space=sflag, size = 0x4, offset = 0, fixed_abs, tag = 'sflag constant byte address 0x0 - dummy sync flag']
  #allocation20 [shape = 's32[]', space=sflag, size = 0x4, offset = 0, fixed_abs, tag = 'sflag constant byte address 0x0 - dummy sync flag']
  #allocation21 [shape = 's32[]', space=sflag, size = 0x4, offset = 0, fixed_abs, tag = 'sflag constant byte address 0x0 - dummy sync flag']
  #allocation22 [shape = 's32[]', space=sflag, size = 0x4, offset = 0, fixed_abs, tag = 'sflag constant byte address 0x0 - dummy sync flag']
  #allocation23 [shape = 's32[]', space=sflag, size = 0x4, offset = 0, fixed_abs, tag = 'sflag constant byte address 0x0 - dummy sync flag']
  #allocation24 [shape = 's32[]', space=sflag, size = 0x4, offset = 0, fixed_abs, tag = 'sflag constant byte address 0x0 - dummy sync flag']
  #allocation25 [shape = 's32[]', space=sflag, size = 0x4, offset = 0, fixed_abs, tag = 'sflag constant byte address 0x0 - dummy sync flag']
  %s0 = inlined_call_operand.hbm [shape: s32[16], index: 0, kind: input, shape index: {}]
  %s1 = inlined_call_operand.hbm [shape: f32[64,128], index: 1, kind: input, shape index: {}]
  %s2 = inlined_call_operand.hbm [shape: f32[16,128], index: 2, kind: output, shape index: {}]
  %s3 = sld [smem:[#allocation0]]
  $region57: #{tpu_custom_call.1} parent=0
    _
  %s5 = ssub.s32 1, %s3
  %s6 = scalar_select 0, %s5, %s3
  %8 = dma.hbm_to_smem %s0, 16, [#allocation5], [#allocation4]
  %9 = dma.done [#allocation4], 16
  %10 = sfence
  $region1: #{tpu_custom_call.1} parent=0
    #allocation6 [shape = 'u8[8192]{0}', space=vmem, size = 0x2000, scoped, tag = 'output window, operand 0']
    #allocation7 [shape = 's32[2]{0}', space=sflag, size = 0x8, scoped, tag = 'scoped memory for tpu_custom_call.1']
    %11 = vsyncpa [#allocation7], 0
    %s12 = scalar_lea.sflag [#allocation7], 1
    %13 = vsyncpa %s12, 0
    loop: start=0, step=1, limit=3
    $region2: #{tpu_custom_call.1} parent=1 // loop_pre_header
      _
    $region3: #{tpu_custom_call.1} parent=1 // loop_header
      %s15 = sphi 0, %s19
      %p16 = scmp.ge.s32.totalorder %s15, 3
      %s24 = sphi 0, %s26
      %s27 = sphi 0, %s24
      %s37 = sphi 0, %s27
    $region4: #{tpu_custom_call.1} parent=1 // loop_header_branch
      %18 = sbr.rel (%p16) target = $region8
    $region5: #{tpu_custom_call.1} parent=1 // loop_body
      %s20 = ssub.s32 %s15, 1
      %s21 = sadd.s32 %s15, 1
      %s22 = ssub.s32 %s15, %s21
      %p23 = scmp.eq.s32.totalorder %s22, 0
      %s25 = sadd.s32 %s24, 1
      %s26 = scalar_select %p23, %s24, %s25
      %p28 = pneg %p23
      %p29 = scmp.eq.s32.totalorder %s15, 1
      %p30 = por %p28, %p29
      %p31 = scmp.ne.s32.totalorder %s24, %s27
      %p32 = scmp.eq.s32.totalorder %s15, 0
      %p33 = por %p31, %p32
      %p34 = scmp.ne.s32.totalorder %s24, %s27
      %p35 = scmp.eq.s32.totalorder %s20, 1
      %p36 = por %p34, %p35
      %p38 = scmp.ne.s32.totalorder %s27, %s37
      %p39 = scmp.eq.s32.totalorder %s20, 0
      %p40 = por %p38, %p39
      %p41 = scmp.lt.s32.totalorder %s15, 2
      // Predicated region
      $region9: #{tpu_custom_call.1} parent=5 // pred_check
        %p42 = pneg %p41
      $region10: #{tpu_custom_call.1} parent=5 // pred_check_branch
        %44 = sbr.rel (%p42) target = $region12
      $region11: #{tpu_custom_call.1} parent=5 // pred_region
        %p45 = pneg %p33
        %p46 = pneg %p30
        %s47 = sand.u32 %s24, 1
        %s48 = scalar_lea.sflag [#allocation7], %s47
        %s49 = sand.u32 %s24, 1
        %s50 = smul.addr %s49, 8
        %s51 = scalar_lea.vmem [#allocation6], %s50
        %s52 = smul.u32 %s15, 8
        %s53 = sld [smem:[#allocation5 + %s52]]
        %p54 = scmp.gt.s32.totalorder %s53, 0
        %s55 = scalar_select %p54, %s53, 0
        %p56 = scmp.lt.s32.totalorder %s55, 63
        %s57 = scalar_select %p56, %s55, 63
        %s58 = smul.addr %s57, 16
        %s59 = scalar_lea.hbm %s1, %s58
        // Predicated region
        $region13: #{tpu_custom_call.1} parent=11 // pred_check
          _
        $region14: #{tpu_custom_call.1} parent=11 // pred_check_branch
          %61 = sbr.rel target = $region16
        $region15: #{tpu_custom_call.1} parent=11 // pred_region
          %62 = sst [smem:[#allocation10]] [#allocation9]
          %63 = sst [smem:[#allocation11]] [#allocation8]
        $region16: #{tpu_custom_call.1} parent=11 // pred_fallthru
          _
        %65 = shalt.err (0)
        %s67 = sshll.u32 [#allocation2], 4
        %s68 = int_to_ptr.vmem [resolvable:$true] %s67
        %70 = dma.hbm_to_vmem [thread:$0]  %s59, 16, %s68, [#allocation3]
        %s71 = sadd.s32 %s52, 1
        %s72 = sld [smem:[#allocation5 + %s71]]
        %p73 = scmp.gt.s32.totalorder %s72, 0
        %s74 = scalar_select %p73, %s72, 0
        %p75 = scmp.lt.s32.totalorder %s74, 63
        %s76 = scalar_select %p75, %s74, 63
        %s77 = smul.addr %s76, 16
        %s78 = scalar_lea.hbm %s1, %s77
        %s79 = scalar_lea.vmem [#allocation2], 1
        %s80 = scalar_lea.sflag [#allocation3], 1
        // Predicated region
        $region17: #{tpu_custom_call.1} parent=11 // pred_check
          _
        $region18: #{tpu_custom_call.1} parent=11 // pred_check_branch
          %82 = sbr.rel target = $region20
        $region19: #{tpu_custom_call.1} parent=11 // pred_region
          %83 = sst [smem:[#allocation10]] [#allocation13]
          %84 = sst [smem:[#allocation11]] [#allocation12]
        $region20: #{tpu_custom_call.1} parent=11 // pred_fallthru
          _
        %86 = shalt.err (0)
        %s88 = sshll.u32 %s79, 4
        %s89 = int_to_ptr.vmem [resolvable:$true] %s88
        %91 = dma.hbm_to_vmem [thread:$0]  %s78, 16, %s89, %s80
        %s92 = sadd.s32 %s52, 2
        %s93 = sld [smem:[#allocation5 + %s92]]
        %p94 = scmp.gt.s32.totalorder %s93, 0
        %s95 = scalar_select %p94, %s93, 0
        %p96 = scmp.lt.s32.totalorder %s95, 63
        %s97 = scalar_select %p96, %s95, 63
        %s98 = smul.addr %s97, 16
        %s99 = scalar_lea.hbm %s1, %s98
        %s100 = scalar_lea.vmem [#allocation2], 2
        %s101 = scalar_lea.sflag [#allocation3], 2
        // Predicated region
        $region21: #{tpu_custom_call.1} parent=11 // pred_check
          _
        $region22: #{tpu_custom_call.1} parent=11 // pred_check_branch
          %103 = sbr.rel target = $region24
        $region23: #{tpu_custom_call.1} parent=11 // pred_region
          %104 = sst [smem:[#allocation10]] [#allocation15]
          %105 = sst [smem:[#allocation11]] [#allocation14]
        $region24: #{tpu_custom_call.1} parent=11 // pred_fallthru
          _
        %107 = shalt.err (0)
        %s109 = sshll.u32 %s100, 4
        %s110 = int_to_ptr.vmem [resolvable:$true] %s109
        %112 = dma.hbm_to_vmem [thread:$0]  %s99, 16, %s110, %s101
        %s113 = sadd.s32 %s52, 3
        %s114 = sld [smem:[#allocation5 + %s113]]
        %p115 = scmp.gt.s32.totalorder %s114, 0
        %s116 = scalar_select %p115, %s114, 0
        %p117 = scmp.lt.s32.totalorder %s116, 63
        %s118 = scalar_select %p117, %s116, 63
        %s119 = smul.addr %s118, 16
        %s120 = scalar_lea.hbm %s1, %s119
        %s121 = scalar_lea.vmem [#allocation2], 3
        %s122 = scalar_lea.sflag [#allocation3], 3
        // Predicated region
        $region25: #{tpu_custom_call.1} parent=11 // pred_check
          _
        $region26: #{tpu_custom_call.1} parent=11 // pred_check_branch
          %124 = sbr.rel target = $region28
        $region27: #{tpu_custom_call.1} parent=11 // pred_region
          %125 = sst [smem:[#allocation10]] [#allocation17]
          %126 = sst [smem:[#allocation11]] [#allocation16]
        $region28: #{tpu_custom_call.1} parent=11 // pred_fallthru
          _
        %128 = shalt.err (0)
        %s130 = sshll.u32 %s121, 4
        %s131 = int_to_ptr.vmem [resolvable:$true] %s130
        %133 = dma.hbm_to_vmem [thread:$0]  %s120, 16, %s131, %s122
        %s134 = sadd.s32 %s52, 4
        %s135 = sld [smem:[#allocation5 + %s134]]
        %p136 = scmp.gt.s32.totalorder %s135, 0
        %s137 = scalar_select %p136, %s135, 0
        %p138 = scmp.lt.s32.totalorder %s137, 63
        %s139 = scalar_select %p138, %s137, 63
        %s140 = smul.addr %s139, 16
        %s141 = scalar_lea.hbm %s1, %s140
        %s142 = scalar_lea.vmem [#allocation2], 4
        %s143 = scalar_lea.sflag [#allocation3], 4
        // Predicated region
        $region29: #{tpu_custom_call.1} parent=11 // pred_check
          _
        $region30: #{tpu_custom_call.1} parent=11 // pred_check_branch
          %145 = sbr.rel target = $region32
        $region31: #{tpu_custom_call.1} parent=11 // pred_region
          %146 = sst [smem:[#allocation10]] [#allocation19]
          %147 = sst [smem:[#allocation11]] [#allocation18]
        $region32: #{tpu_custom_call.1} parent=11 // pred_fallthru
          _
        %149 = shalt.err (0)
        %s151 = sshll.u32 %s142, 4
        %s152 = int_to_ptr.vmem [resolvable:$true] %s151
        %154 = dma.hbm_to_vmem [thread:$0]  %s141, 16, %s152, %s143
        %s155 = sadd.s32 %s52, 5
        %s156 = sld [smem:[#allocation5 + %s155]]
        %p157 = scmp.gt.s32.totalorder %s156, 0
        %s158 = scalar_select %p157, %s156, 0
        %p159 = scmp.lt.s32.totalorder %s158, 63
        %s160 = scalar_select %p159, %s158, 63
        %s161 = smul.addr %s160, 16
        %s162 = scalar_lea.hbm %s1, %s161
        %s163 = scalar_lea.vmem [#allocation2], 5
        %s164 = scalar_lea.sflag [#allocation3], 5
        // Predicated region
        $region33: #{tpu_custom_call.1} parent=11 // pred_check
          _
        $region34: #{tpu_custom_call.1} parent=11 // pred_check_branch
          %166 = sbr.rel target = $region36
        $region35: #{tpu_custom_call.1} parent=11 // pred_region
          %167 = sst [smem:[#allocation10]] [#allocation21]
          %168 = sst [smem:[#allocation11]] [#allocation20]
        $region36: #{tpu_custom_call.1} parent=11 // pred_fallthru
          _
        %170 = shalt.err (0)
        %s172 = sshll.u32 %s163, 4
        %s173 = int_to_ptr.vmem [resolvable:$true] %s172
        %175 = dma.hbm_to_vmem [thread:$0]  %s162, 16, %s173, %s164
        %s176 = sadd.s32 %s52, 6
        %s177 = sld [smem:[#allocation5 + %s176]]
        %p178 = scmp.gt.s32.totalorder %s177, 0
        %s179 = scalar_select %p178, %s177, 0
        %p180 = scmp.lt.s32.totalorder %s179, 63
        %s181 = scalar_select %p180, %s179, 63
        %s182 = smul.addr %s181, 16
        %s183 = scalar_lea.hbm %s1, %s182
        %s184 = scalar_lea.vmem [#allocation2], 6
        %s185 = scalar_lea.sflag [#allocation3], 6
        // Predicated region
        $region37: #{tpu_custom_call.1} parent=11 // pred_check
          _
        $region38: #{tpu_custom_call.1} parent=11 // pred_check_branch
          %187 = sbr.rel target = $region40
        $region39: #{tpu_custom_call.1} parent=11 // pred_region
          %188 = sst [smem:[#allocation10]] [#allocation23]
          %189 = sst [smem:[#allocation11]] [#allocation22]
        $region40: #{tpu_custom_call.1} parent=11 // pred_fallthru
          _
        %191 = shalt.err (0)
        %s193 = sshll.u32 %s184, 4
        %s194 = int_to_ptr.vmem [resolvable:$true] %s193
        %196 = dma.hbm_to_vmem [thread:$0]  %s183, 16, %s194, %s185
        %s197 = sadd.s32 %s52, 7
        %s198 = sld [smem:[#allocation5 + %s197]]
        %p199 = scmp.gt.s32.totalorder %s198, 0
        %s200 = scalar_select %p199, %s198, 0
        %p201 = scmp.lt.s32.totalorder %s200, 63
        %s202 = scalar_select %p201, %s200, 63
        %s203 = smul.addr %s202, 16
        %s204 = scalar_lea.hbm %s1, %s203
        %s205 = scalar_lea.vmem [#allocation2], 7
        %s206 = scalar_lea.sflag [#allocation3], 7
        // Predicated region
        $region41: #{tpu_custom_call.1} parent=11 // pred_check
          _
        $region42: #{tpu_custom_call.1} parent=11 // pred_check_branch
          %208 = sbr.rel target = $region44
        $region43: #{tpu_custom_call.1} parent=11 // pred_region
          %209 = sst [smem:[#allocation10]] [#allocation25]
          %210 = sst [smem:[#allocation11]] [#allocation24]
        $region44: #{tpu_custom_call.1} parent=11 // pred_fallthru
          _
        %212 = shalt.err (0)
        %s214 = sshll.u32 %s205, 4
        %s215 = int_to_ptr.vmem [resolvable:$true] %s214
        %217 = dma.hbm_to_vmem [thread:$0]  %s204, 16, %s215, %s206
        %s218 = smul.u32 1, 1
        %s219 = sshll.u32 %s218, 4
        %220 = dma.done [#allocation3], %s219
        %s221 = sshll.u32 %s218, 4
        %222 = dma.done %s80, %s221
        %s223 = sshll.u32 %s218, 4
        %224 = dma.done %s101, %s223
        %s225 = sshll.u32 %s218, 4
        %226 = dma.done %s122, %s225
        %s227 = sshll.u32 %s218, 4
        %228 = dma.done %s143, %s227
        %s229 = sshll.u32 %s218, 4
        %230 = dma.done %s164, %s229
        %s231 = sshll.u32 %s218, 4
        %232 = dma.done %s185, %s231
        %s233 = sshll.u32 %s218, 4
        %234 = dma.done %s206, %s233
        %v235 = vld [vmem:[#allocation2] sm:$0xff]
        %v236 = vmul.f32 %v235, 11.313708
        %237 = vst [vmem:[%s51] sm:$0xff] %v236
        %s238 = sand.u32 %s24, 1
        %s239 = scalar_lea.sflag [#allocation7], %s238
        %s240 = sand.u32 %s24, 1
        %s241 = smul.addr %s240, 8
        %s242 = scalar_lea.vmem [#allocation6], %s241
        // Predicated region
        $region45: #{tpu_custom_call.1} parent=11 // pred_check
          %p243 = pneg %p30
        $region46: #{tpu_custom_call.1} parent=11 // pred_check_branch
          %245 = sbr.rel (%p243) target = $region48
        $region47: #{tpu_custom_call.1} parent=11 // pred_region
          %s247 = ssub.s32 128, 128
          %248 = vsyncadd %s239, %s247
          %s249 = smul.addr %s15, 128
          %s250 = scalar_lea.hbm %s2, %s249
          %s252 = sshll.u32 %s242, 4
          %s253 = int_to_ptr.vmem [resolvable:$true] %s252
          %255 = dma.vmem_to_hbm [thread:$0]  %s253, 128, %s250, %s239
        $region48: #{tpu_custom_call.1} parent=11 // pred_fallthru
          _
      $region12: #{tpu_custom_call.1} parent=5 // pred_fallthru
        _
      %p256 = scmp.le.s32.totalorder 1, %s15
      // Predicated region
      $region49: #{tpu_custom_call.1} parent=5 // pred_check
        %p257 = pneg %p256
      $region50: #{tpu_custom_call.1} parent=5 // pred_check_branch
        %259 = sbr.rel (%p257) target = $region52
      $region51: #{tpu_custom_call.1} parent=5 // pred_region
        %s260 = ssub.s32 %s15, 1
        // Predicated region
        $region53: #{tpu_custom_call.1} parent=51 // pred_check
          %p261 = pneg %p36
        $region54: #{tpu_custom_call.1} parent=51 // pred_check_branch
          %263 = sbr.rel (%p261) target = $region56
        $region55: #{tpu_custom_call.1} parent=51 // pred_region
          %s264 = sand.u32 %s27, 1
          %s265 = scalar_lea.sflag [#allocation7], %s264
          %s266 = sand.u32 %s27, 1
          %s267 = smul.addr %s266, 8
          %s268 = scalar_lea.vmem [#allocation6], %s267
          %269 = dma.done %s265, 128
        $region56: #{tpu_custom_call.1} parent=51 // pred_fallthru
          _
      $region52: #{tpu_custom_call.1} parent=5 // pred_fallthru
        _
    $region6: #{tpu_custom_call.1} parent=1 // loop_footer
      %s19 = sadd.s32 1, %s15
    $region7: #{tpu_custom_call.1} parent=1 // loop_footer_branch
      %14 = sbr.rel target = $region3
    $region8: #{tpu_custom_call.1} parent=1 // loop_exit
      _
    %270 = vsyncpa [#allocation7], 1
    %s271 = scalar_lea.sflag [#allocation7], 1
    %272 = vsyncpa %s271, 1
  %273 = vsyncmov [#allocation3]
  %s274 = vpop.sfrf %273
  %p275 = scmp.eq.s32.totalorder %s274, 0
  %p276 = pneg %p275
  %278 = shalt.err (%p276)
  %s279 = scalar_lea.sflag [#allocation3], 1
  %280 = vsyncmov %s279
  %s281 = vpop.sfrf %280
  %p282 = scmp.eq.s32.totalorder %s281, 0
  %p283 = pneg %p282
  %285 = shalt.err (%p283)
  %s286 = scalar_lea.sflag [#allocation3], 2
  %287 = vsyncmov %s286
  %s288 = vpop.sfrf %287
  %p289 = scmp.eq.s32.totalorder %s288, 0
  %p290 = pneg %p289
  %292 = shalt.err (%p290)
  %s293 = scalar_lea.sflag [#allocation3], 3
  %294 = vsyncmov %s293
  %s295 = vpop.sfrf %294
  %p296 = scmp.eq.s32.totalorder %s295, 0
  %p297 = pneg %p296
  %299 = shalt.err (%p297)
  %s300 = scalar_lea.sflag [#allocation3], 4
  %301 = vsyncmov %s300
  %s302 = vpop.sfrf %301
  %p303 = scmp.eq.s32.totalorder %s302, 0
  %p304 = pneg %p303
  %306 = shalt.err (%p304)
  %s307 = scalar_lea.sflag [#allocation3], 5
  %308 = vsyncmov %s307
  %s309 = vpop.sfrf %308
  %p310 = scmp.eq.s32.totalorder %s309, 0
  %p311 = pneg %p310
  %313 = shalt.err (%p311)
  %s314 = scalar_lea.sflag [#allocation3], 6
  %315 = vsyncmov %s314
  %s316 = vpop.sfrf %315
  %p317 = scmp.eq.s32.totalorder %s316, 0
  %p318 = pneg %p317
  %320 = shalt.err (%p318)
  %s321 = scalar_lea.sflag [#allocation3], 7
  %322 = vsyncmov %s321
  %s323 = vpop.sfrf %322
  %p324 = scmp.eq.s32.totalorder %s323, 0
  %p325 = pneg %p324
  %327 = shalt.err (%p325)

</llo_original>
